<compile_context>
chip_gen: v7x
topology: tpu7x:2x2x1
jax: 0.10.0
libtpu: 0.0.40
codegen_flags: <defaults>
</compile_context>

<pallas_src>
import jax
import jax.numpy as jnp
from jax.experimental import pallas as pl
from jax.experimental.pallas import tpu as pltpu

MAX_TB = 1024  # max rows per grid step; per-step VMEM stays << scoped limits


def mlp3_kernel(x_ref,
                w1_ref, b1_ref,
                w2_ref, b2_ref,
                w3_ref, b3_ref,
                w4_ref, b4_ref,
                o_ref):
    # x arrives f32; cast to bf16 only for the MXU operands.
    h = x_ref[...].astype(w1_ref.dtype)
    # fc1 + relu  (bf16 operands, f32 accumulate, f32 epilogue)
    h = jnp.dot(h, w1_ref[...], preferred_element_type=jnp.float32)
    h = jnp.maximum(h + b1_ref[...], 0.0)
    # fc2 + relu
    h = jnp.dot(h.astype(w2_ref.dtype), w2_ref[...],
                preferred_element_type=jnp.float32)
    h = jnp.maximum(h + b2_ref[...], 0.0)
    # fc3 + relu
    h = jnp.dot(h.astype(w3_ref.dtype), w3_ref[...],
                preferred_element_type=jnp.float32)
    h = jnp.maximum(h + b3_ref[...], 0.0)
    # fc4 (no activation); unpadded (tb, n_out) f32 store
    h = jnp.dot(h.astype(w4_ref.dtype), w4_ref[...],
                preferred_element_type=jnp.float32)
    o_ref[...] = (h + b4_ref[...]).astype(o_ref.dtype)


def _round_up(x, m):
    return ((x + m - 1) // m) * m


def prepare_params(params):
    """One-time prep (outside the per-call path): bf16 weights, f32 (1,out) biases."""
    prepped = []
    for w, b in params:
        prepped.append((jnp.asarray(w, jnp.bfloat16),
                        jnp.asarray(b, jnp.float32).reshape(1, -1)))
    return prepped


@jax.jit
def mlp3_forward(x, params):
    """x: (B, n_input) f32.  params: output of prepare_params()."""
    B, n_in = x.shape
    n_out = params[-1][0].shape[1]

    # --- tiling: minimize grid steps; even tile count for v7x megacore ---
    if B <= MAX_TB:
        n_tiles = 1
    else:
        n_tiles = pl.cdiv(B, MAX_TB)
        if n_tiles % 2:
            n_tiles += 1            # balanced 2-TC split on v7x
    tb = _round_up(pl.cdiv(B, n_tiles), 8)   # sublane-aligned rows per step
    b_pad = n_tiles * tb
    if b_pad != B:
        x = jnp.pad(x, ((0, b_pad - B), (0, 0)))

    # weights / biases: whole-array blocks, resident across the grid
    flat_args = []
    param_specs = []
    const_map = lambda i: (0, 0)
    for w, b in params:
        flat_args.append(w)
        param_specs.append(pl.BlockSpec(w.shape, const_map))
        flat_args.append(b)
        param_specs.append(pl.BlockSpec(b.shape, const_map))

    x_spec = pl.BlockSpec((tb, n_in), lambda i: (i, 0))
    out_spec = pl.BlockSpec((tb, n_out), lambda i: (i, 0))

    out = pl.pallas_call(
        mlp3_kernel,
        out_shape=jax.ShapeDtypeStruct((b_pad, n_out), jnp.float32),
        grid_spec=pltpu.PrefetchScalarGridSpec(
            num_scalar_prefetch=0,
            grid=(n_tiles,),
            in_specs=[x_spec] + param_specs,
            out_specs=out_spec,
        ),
        compiler_params=pltpu.CompilerParams(
            dimension_semantics=("parallel",)),
    )(x, *flat_args)

    return out[:B]


def init_params(key, dims):
    """Deterministic synthetic init. dims = [n_input, h1, h2, h3, n_output]."""
    params = []
    for i in range(len(dims) - 1):
        kin, kout = dims[i], dims[i + 1]
        key, kw, kb = jax.random.split(key, 3)
        # Uniform(-1/sqrt(fan_in), 1/sqrt(fan_in)) — PyTorch nn.Linear default.
        bound = 1.0 / (kin ** 0.5)
        w = jax.random.uniform(kw, (kin, kout), jnp.float32, -bound, bound)
        b = jax.random.uniform(kb, (1, kout), jnp.float32, -bound, bound)
        params.append((w, b))
    return params


def mlp3_ref_bf16(x, params):
    """Pure-JAX reference with the kernel's bf16-operand / f32-accumulate recipe."""
    h = x
    n_layers = len(params)
    for i, (w, b) in enumerate(params):
        h = jnp.dot(h.astype(jnp.bfloat16), w.astype(jnp.bfloat16),
                    preferred_element_type=jnp.float32) + b.astype(jnp.float32)
        if i < n_layers - 1:
            h = jnp.maximum(h, 0.0)
    return h


def mlp3_ref_f32(x, params):
    h = x
    n_layers = len(params)
    for i, (w, b) in enumerate(params):
        h = h @ w + b
        if i < n_layers - 1:
            h = jnp.maximum(h, 0.0)
    return h


if __name__ == "__main__":
    key = jax.random.PRNGKey(0)
    kx, kp, kx2 = jax.random.split(key, 3)

    # MLP3Layer(n_input=32, n_hidden_1=64, n_hidden_2=64,
    #           n_hidden_3=32, n_output=8)
    dims = [32, 64, 64, 32, 8]
    params = init_params(kp, dims)
    prepped = prepare_params(params)   # one-time bf16 cast, outside the hot path

    # Case 1: B=300 (non-multiple of 8 -> exercises batch padding, single tile)
    B1 = 300
    x1 = jax.random.normal(kx, (B1, dims[0]), jnp.float32)
    out1 = jax.block_until_ready(mlp3_forward(x1, prepped))
    assert out1.shape == (B1, dims[-1])
    assert jnp.allclose(out1, mlp3_ref_bf16(x1, params), atol=1e-3, rtol=1e-3), \
        "B=300: mismatch vs bf16-operand reference"
    assert jnp.allclose(out1, mlp3_ref_f32(x1, params), atol=5e-2, rtol=5e-2), \
        "B=300: mismatch vs f32 reference"

    # Case 2: B=2500 (> MAX_TB -> multi-tile path, even tile count)
    B2 = 2500
    x2 = jax.random.normal(kx2, (B2, dims[0]), jnp.float32)
    out2 = jax.block_until_ready(mlp3_forward(x2, prepped))
    assert out2.shape == (B2, dims[-1])
    assert jnp.allclose(out2, mlp3_ref_bf16(x2, params), atol=1e-3, rtol=1e-3), \
        "B=2500: mismatch vs bf16-operand reference"
    assert jnp.allclose(out2, mlp3_ref_f32(x2, params), atol=5e-2, rtol=5e-2), \
        "B=2500: mismatch vs f32 reference"

    print("KERNEL_OK")
</pallas_src>

<mosaic_0001>
module attributes {stable_mosaic.version = 11 : i64} {
  func.func @mlp3_kernel(%arg0: i32, %arg1: memref<304x32xf32, #tpu.memory_space<vmem>>, %arg2: memref<32x64xbf16, #tpu.memory_space<vmem>>, %arg3: memref<1x64xf32, #tpu.memory_space<vmem>>, %arg4: memref<64x64xbf16, #tpu.memory_space<vmem>>, %arg5: memref<1x64xf32, #tpu.memory_space<vmem>>, %arg6: memref<64x32xbf16, #tpu.memory_space<vmem>>, %arg7: memref<1x32xf32, #tpu.memory_space<vmem>>, %arg8: memref<32x8xbf16, #tpu.memory_space<vmem>>, %arg9: memref<1x8xf32, #tpu.memory_space<vmem>>, %arg10: memref<304x8xf32, #tpu.memory_space<vmem>>) attributes {dimension_semantics = [#tpu.dimension_semantics<parallel>], iteration_bounds = array<i64: 1>, scalar_prefetch = 0 : i64, scratch_operands = 0 : i64, tpu.core_type = #tpu.core_type<tc>, window_params = [{transform_indices = @transform_0, window_bounds = array<i64: 304, 32>}, {pipeline_mode = #tpu.pipeline_mode<synchronous>, transform_indices = @transform_1, window_bounds = array<i64: 32, 64>}, {pipeline_mode = #tpu.pipeline_mode<synchronous>, transform_indices = @transform_2, window_bounds = array<i64: 1, 64>}, {pipeline_mode = #tpu.pipeline_mode<synchronous>, transform_indices = @transform_3, window_bounds = array<i64: 64, 64>}, {pipeline_mode = #tpu.pipeline_mode<synchronous>, transform_indices = @transform_4, window_bounds = array<i64: 1, 64>}, {pipeline_mode = #tpu.pipeline_mode<synchronous>, transform_indices = @transform_5, window_bounds = array<i64: 64, 32>}, {pipeline_mode = #tpu.pipeline_mode<synchronous>, transform_indices = @transform_6, window_bounds = array<i64: 1, 32>}, {pipeline_mode = #tpu.pipeline_mode<synchronous>, transform_indices = @transform_7, window_bounds = array<i64: 32, 8>}, {pipeline_mode = #tpu.pipeline_mode<synchronous>, transform_indices = @transform_8, window_bounds = array<i64: 1, 8>}, {transform_indices = @transform_9, window_bounds = array<i64: 304, 8>}]} {
    %c0 = arith.constant 0 : index
    %c0_0 = arith.constant 0 : index
    %0 = vector.load %arg1[%c0, %c0_0] : memref<304x32xf32, #tpu.memory_space<vmem>>, vector<304x32xf32>
    %1 = arith.truncf %0 : vector<304x32xf32> to vector<304x32xbf16>
    %c0_1 = arith.constant 0 : index
    %c0_2 = arith.constant 0 : index
    %2 = vector.load %arg2[%c0_1, %c0_2] : memref<32x64xbf16, #tpu.memory_space<vmem>>, vector<32x64xbf16>
    %cst = arith.constant dense<0.000000e+00> : vector<304x64xf32>
    %3 = tpu.matmul %1, %2, %cst {dimension_numbers = #tpu.dot_dimension_numbers<[1], [0], [0], [1], [0, 0, 1, 1], [], []>} : vector<304x32xbf16>, vector<32x64xbf16>, vector<304x64xf32> -> vector<304x64xf32>
    %c0_3 = arith.constant 0 : index
    %c0_4 = arith.constant 0 : index
    %4 = vector.load %arg3[%c0_3, %c0_4] : memref<1x64xf32, #tpu.memory_space<vmem>>, vector<1x64xf32>
    %5 = vector.broadcast %4 : vector<1x64xf32> to vector<304x64xf32>
    %6 = arith.addf %3, %5 : vector<304x64xf32>
    %cst_5 = arith.constant 0.000000e+00 : f32
    %7 = vector.broadcast %cst_5 : f32 to vector<304x64xf32>
    %8 = arith.maximumf %6, %7 : vector<304x64xf32>
    %9 = arith.truncf %8 : vector<304x64xf32> to vector<304x64xbf16>
    %c0_6 = arith.constant 0 : index
    %c0_7 = arith.constant 0 : index
    %10 = vector.load %arg4[%c0_6, %c0_7] : memref<64x64xbf16, #tpu.memory_space<vmem>>, vector<64x64xbf16>
    %cst_8 = arith.constant dense<0.000000e+00> : vector<304x64xf32>
    %11 = tpu.matmul %9, %10, %cst_8 {dimension_numbers = #tpu.dot_dimension_numbers<[1], [0], [0], [1], [0, 0, 1, 1], [], []>} : vector<304x64xbf16>, vector<64x64xbf16>, vector<304x64xf32> -> vector<304x64xf32>
    %c0_9 = arith.constant 0 : index
    %c0_10 = arith.constant 0 : index
    %12 = vector.load %arg5[%c0_9, %c0_10] : memref<1x64xf32, #tpu.memory_space<vmem>>, vector<1x64xf32>
    %13 = vector.broadcast %12 : vector<1x64xf32> to vector<304x64xf32>
    %14 = arith.addf %11, %13 : vector<304x64xf32>
    %cst_11 = arith.constant 0.000000e+00 : f32
    %15 = vector.broadcast %cst_11 : f32 to vector<304x64xf32>
    %16 = arith.maximumf %14, %15 : vector<304x64xf32>
    %17 = arith.truncf %16 : vector<304x64xf32> to vector<304x64xbf16>
    %c0_12 = arith.constant 0 : index
    %c0_13 = arith.constant 0 : index
    %18 = vector.load %arg6[%c0_12, %c0_13] : memref<64x32xbf16, #tpu.memory_space<vmem>>, vector<64x32xbf16>
    %cst_14 = arith.constant dense<0.000000e+00> : vector<304x32xf32>
    %19 = tpu.matmul %17, %18, %cst_14 {dimension_numbers = #tpu.dot_dimension_numbers<[1], [0], [0], [1], [0, 0, 1, 1], [], []>} : vector<304x64xbf16>, vector<64x32xbf16>, vector<304x32xf32> -> vector<304x32xf32>
    %c0_15 = arith.constant 0 : index
    %c0_16 = arith.constant 0 : index
    %20 = vector.load %arg7[%c0_15, %c0_16] : memref<1x32xf32, #tpu.memory_space<vmem>>, vector<1x32xf32>
    %21 = vector.broadcast %20 : vector<1x32xf32> to vector<304x32xf32>
    %22 = arith.addf %19, %21 : vector<304x32xf32>
    %cst_17 = arith.constant 0.000000e+00 : f32
    %23 = vector.broadcast %cst_17 : f32 to vector<304x32xf32>
    %24 = arith.maximumf %22, %23 : vector<304x32xf32>
    %25 = arith.truncf %24 : vector<304x32xf32> to vector<304x32xbf16>
    %c0_18 = arith.constant 0 : index
    %c0_19 = arith.constant 0 : index
    %26 = vector.load %arg8[%c0_18, %c0_19] : memref<32x8xbf16, #tpu.memory_space<vmem>>, vector<32x8xbf16>
    %cst_20 = arith.constant dense<0.000000e+00> : vector<304x8xf32>
    %27 = tpu.matmul %25, %26, %cst_20 {dimension_numbers = #tpu.dot_dimension_numbers<[1], [0], [0], [1], [0, 0, 1, 1], [], []>} : vector<304x32xbf16>, vector<32x8xbf16>, vector<304x8xf32> -> vector<304x8xf32>
    %c0_21 = arith.constant 0 : index
    %c0_22 = arith.constant 0 : index
    %28 = vector.load %arg9[%c0_21, %c0_22] : memref<1x8xf32, #tpu.memory_space<vmem>>, vector<1x8xf32>
    %29 = vector.broadcast %28 : vector<1x8xf32> to vector<304x8xf32>
    %30 = arith.addf %27, %29 : vector<304x8xf32>
    %c0_23 = arith.constant 0 : index
    %c0_24 = arith.constant 0 : index
    %31 = vector.load %arg10[%c0_23, %c0_24] : memref<304x8xf32, #tpu.memory_space<vmem>>, vector<304x8xf32>
    tpu.vector_store %arg10[%c0_23, %c0_24], %30 {strides = array<i32>} : memref<304x8xf32, #tpu.memory_space<vmem>>, vector<304x8xf32>,
    return
  }
  func.func @transform_0(%arg0: i32) -> (i32, i32) {
    %c0_i32 = arith.constant 0 : i32
    %c0_i32_0 = arith.constant 0 : i32
    return %arg0, %c0_i32 : i32, i32
  }
  func.func @transform_1(%arg0: i32) -> (i32, i32) {
    %c0_i32 = arith.constant 0 : i32
    %c0_i32_0 = arith.constant 0 : i32
    %c0_i32_1 = arith.constant 0 : i32
    return %c0_i32, %c0_i32_0 : i32, i32
  }
  func.func @transform_2(%arg0: i32) -> (i32, i32) {
    %c0_i32 = arith.constant 0 : i32
    %c0_i32_0 = arith.constant 0 : i32
    %c0_i32_1 = arith.constant 0 : i32
    return %c0_i32, %c0_i32_0 : i32, i32
  }
  func.func @transform_3(%arg0: i32) -> (i32, i32) {
    %c0_i32 = arith.constant 0 : i32
    %c0_i32_0 = arith.constant 0 : i32
    %c0_i32_1 = arith.constant 0 : i32
    return %c0_i32, %c0_i32_0 : i32, i32
  }
  func.func @transform_4(%arg0: i32) -> (i32, i32) {
    %c0_i32 = arith.constant 0 : i32
    %c0_i32_0 = arith.constant 0 : i32
    %c0_i32_1 = arith.constant 0 : i32
    return %c0_i32, %c0_i32_0 : i32, i32
  }
  func.func @transform_5(%arg0: i32) -> (i32, i32) {
    %c0_i32 = arith.constant 0 : i32
    %c0_i32_0 = arith.constant 0 : i32
    %c0_i32_1 = arith.constant 0 : i32
    return %c0_i32, %c0_i32_0 : i32, i32
  }
  func.func @transform_6(%arg0: i32) -> (i32, i32) {
    %c0_i32 = arith.constant 0 : i32
    %c0_i32_0 = arith.constant 0 : i32
    %c0_i32_1 = arith.constant 0 : i32
    return %c0_i32, %c0_i32_0 : i32, i32
  }
  func.func @transform_7(%arg0: i32) -> (i32, i32) {
    %c0_i32 = arith.constant 0 : i32
    %c0_i32_0 = arith.constant 0 : i32
    %c0_i32_1 = arith.constant 0 : i32
    return %c0_i32, %c0_i32_0 : i32, i32
  }
  func.func @transform_8(%arg0: i32) -> (i32, i32) {
    %c0_i32 = arith.constant 0 : i32
    %c0_i32_0 = arith.constant 0 : i32
    %c0_i32_1 = arith.constant 0 : i32
    return %c0_i32, %c0_i32_0 : i32, i32
  }
  func.func @transform_9(%arg0: i32) -> (i32, i32) {
    %c0_i32 = arith.constant 0 : i32
    %c0_i32_0 = arith.constant 0 : i32
    return %arg0, %c0_i32 : i32, i32
  }
}

</mosaic_0001>

<llo_original>
// kernel: mlp3_forward.1
$region0: #{mlp3_forward.1}
  #allocation0 [shape = 'u32[]', space=smem, size = 0x4, offset = 0x4, fixed_abs, tag = 'smem constant byte address 0x4 - core index']
  #allocation1 [shape = 'u32[144,128]{1,0:T(1,128)}', space=vmem, size = 0x12000, scoped, tag = 'internal scratch']
  %s0 = inlined_call_operand.vmem [shape: f32[304,32], index: 0, kind: input, shape index: {}]
  %s1 = inlined_call_operand.vmem [shape: bf16[32,64], index: 1, kind: input, shape index: {}]
  %s2 = inlined_call_operand.vmem [shape: f32[1,64], index: 2, kind: input, shape index: {}]
  %s3 = inlined_call_operand.vmem [shape: bf16[64,64], index: 3, kind: input, shape index: {}]
  %s4 = inlined_call_operand.vmem [shape: f32[1,64], index: 4, kind: input, shape index: {}]
  %s5 = inlined_call_operand.vmem [shape: bf16[64,32], index: 5, kind: input, shape index: {}]
  %s6 = inlined_call_operand.vmem [shape: f32[1,32], index: 6, kind: input, shape index: {}]
  %s7 = inlined_call_operand.vmem [shape: bf16[32,8], index: 7, kind: input, shape index: {}]
  %s8 = inlined_call_operand.vmem [shape: f32[1,8], index: 8, kind: input, shape index: {}]
  %s9 = inlined_call_operand.vmem [shape: f32[304,8], index: 9, kind: output, shape index: {}]
  %s10 = sld [smem:[#allocation0]]
  $region46: #{mlp3_forward.1} parent=0
    _
  %s12 = ssub.s32 1, %s10
  %s13 = scalar_select 0, %s12, %s10
  // Predicated region
  $region2: #{mlp3_forward.1} parent=0 // pred_check
    _
  $region3: #{mlp3_forward.1} parent=0 // pred_check_branch
    %15 = sbr.rel (0) target = $region5
  $region4: #{mlp3_forward.1} parent=0 // pred_region
    _
  $region5: #{mlp3_forward.1} parent=0 // pred_fallthru
    _
  // Predicated region
  $region6: #{mlp3_forward.1} parent=0 // pred_check
    _
  $region7: #{mlp3_forward.1} parent=0 // pred_check_branch
    %17 = sbr.rel (0) target = $region9
  $region8: #{mlp3_forward.1} parent=0 // pred_region
    _
  $region9: #{mlp3_forward.1} parent=0 // pred_fallthru
    _
  // Predicated region
  $region10: #{mlp3_forward.1} parent=0 // pred_check
    _
  $region11: #{mlp3_forward.1} parent=0 // pred_check_branch
    %19 = sbr.rel (0) target = $region13
  $region12: #{mlp3_forward.1} parent=0 // pred_region
    _
  $region13: #{mlp3_forward.1} parent=0 // pred_fallthru
    _
  // Predicated region
  $region14: #{mlp3_forward.1} parent=0 // pred_check
    _
  $region15: #{mlp3_forward.1} parent=0 // pred_check_branch
    %21 = sbr.rel (0) target = $region17
  $region16: #{mlp3_forward.1} parent=0 // pred_region
    _
  $region17: #{mlp3_forward.1} parent=0 // pred_fallthru
    _
  // Predicated region
  $region18: #{mlp3_forward.1} parent=0 // pred_check
    _
  $region19: #{mlp3_forward.1} parent=0 // pred_check_branch
    %23 = sbr.rel (0) target = $region21
  $region20: #{mlp3_forward.1} parent=0 // pred_region
    _
  $region21: #{mlp3_forward.1} parent=0 // pred_fallthru
    _
  // Predicated region
  $region22: #{mlp3_forward.1} parent=0 // pred_check
    _
  $region23: #{mlp3_forward.1} parent=0 // pred_check_branch
    %25 = sbr.rel (0) target = $region25
  $region24: #{mlp3_forward.1} parent=0 // pred_region
    _
  $region25: #{mlp3_forward.1} parent=0 // pred_fallthru
    _
  // Predicated region
  $region26: #{mlp3_forward.1} parent=0 // pred_check
    _
  $region27: #{mlp3_forward.1} parent=0 // pred_check_branch
    %27 = sbr.rel (0) target = $region29
  $region28: #{mlp3_forward.1} parent=0 // pred_region
    _
  $region29: #{mlp3_forward.1} parent=0 // pred_fallthru
    _
  // Predicated region
  $region30: #{mlp3_forward.1} parent=0 // pred_check
    _
  $region31: #{mlp3_forward.1} parent=0 // pred_check_branch
    %29 = sbr.rel (0) target = $region33
  $region32: #{mlp3_forward.1} parent=0 // pred_region
    _
  $region33: #{mlp3_forward.1} parent=0 // pred_fallthru
    _
  // Predicated region
  $region34: #{mlp3_forward.1} parent=0 // pred_check
    _
  $region35: #{mlp3_forward.1} parent=0 // pred_check_branch
    %31 = sbr.rel (0) target = $region37
  $region36: #{mlp3_forward.1} parent=0 // pred_region
    _
  $region37: #{mlp3_forward.1} parent=0 // pred_fallthru
    _
  %v33 = vld [vmem:[%s0] sm:$0xff]
  %v34 = vld [vmem:[%s0 + $0x8] sm:$0xff]
  %v35 = vld [vmem:[%s0 + $0x10] sm:$0xff]
  %v36 = vld [vmem:[%s0 + $0x18] sm:$0xff]
  %v37 = vld [vmem:[%s0 + $0x20] sm:$0xff]
  %v38 = vld [vmem:[%s0 + $0x28] sm:$0xff]
  %v39 = vld [vmem:[%s0 + $0x30] sm:$0xff]
  %v40 = vld [vmem:[%s0 + $0x38] sm:$0xff]
  %v41 = vld [vmem:[%s0 + $0x40] sm:$0xff]
  %v42 = vld [vmem:[%s0 + $0x48] sm:$0xff]
  %v43 = vld [vmem:[%s0 + $0x50] sm:$0xff]
  %v44 = vld [vmem:[%s0 + $0x58] sm:$0xff]
  %v45 = vld [vmem:[%s0 + $0x60] sm:$0xff]
  %v46 = vld [vmem:[%s0 + $0x68] sm:$0xff]
  %v47 = vld [vmem:[%s0 + $0x70] sm:$0xff]
  %v48 = vld [vmem:[%s0 + $0x78] sm:$0xff]
  %v49 = vld [vmem:[%s0 + $0x80] sm:$0xff]
  %v50 = vld [vmem:[%s0 + $0x88] sm:$0xff]
  %v51 = vld [vmem:[%s0 + $0x90] sm:$0xff]
  %v52 = vld [vmem:[%s0 + $0x98] sm:$0xff]
  %v53 = vld [vmem:[%s0 + $0xa0] sm:$0xff]
  %v54 = vld [vmem:[%s0 + $0xa8] sm:$0xff]
  %v55 = vld [vmem:[%s0 + $0xb0] sm:$0xff]
  %v56 = vld [vmem:[%s0 + $0xb8] sm:$0xff]
  %v57 = vld [vmem:[%s0 + $0xc0] sm:$0xff]
  %v58 = vld [vmem:[%s0 + $0xc8] sm:$0xff]
  %v59 = vld [vmem:[%s0 + $0xd0] sm:$0xff]
  %v60 = vld [vmem:[%s0 + $0xd8] sm:$0xff]
  %v61 = vld [vmem:[%s0 + $0xe0] sm:$0xff]
  %v62 = vld [vmem:[%s0 + $0xe8] sm:$0xff]
  %v63 = vld [vmem:[%s0 + $0xf0] sm:$0xff]
  %v64 = vld [vmem:[%s0 + $0xf8] sm:$0xff]
  %v65 = vld [vmem:[%s0 + $0x100] sm:$0xff]
  %v66 = vld [vmem:[%s0 + $0x108] sm:$0xff]
  %v67 = vld [vmem:[%s0 + $0x110] sm:$0xff]
  %v68 = vld [vmem:[%s0 + $0x118] sm:$0xff]
  %v69 = vld [vmem:[%s0 + $0x120] sm:$0xff]
  %v70 = vld [vmem:[%s0 + $0x128] sm:$0xff]
  %v71 = vpack.c.bf16 %v34, %v33
  %v72 = vpack.c.bf16 %v36, %v35
  %v73 = vpack.c.bf16 %v38, %v37
  %v74 = vpack.c.bf16 %v40, %v39
  %v75 = vpack.c.bf16 %v42, %v41
  %v76 = vpack.c.bf16 %v44, %v43
  %v77 = vpack.c.bf16 %v46, %v45
  %v78 = vpack.c.bf16 %v48, %v47
  %v79 = vpack.c.bf16 %v50, %v49
  %v80 = vpack.c.bf16 %v52, %v51
  %v81 = vpack.c.bf16 %v54, %v53
  %v82 = vpack.c.bf16 %v56, %v55
  %v83 = vpack.c.bf16 %v58, %v57
  %v84 = vpack.c.bf16 %v60, %v59
  %v85 = vpack.c.bf16 %v62, %v61
  %v86 = vpack.c.bf16 %v64, %v63
  %v87 = vpack.c.bf16 %v66, %v65
  %v88 = vpack.c.bf16 %v68, %v67
  %v89 = vpack.c.bf16 %v70, %v69
  %v90 = vld [vmem:[%s1] sm:$0xf]
  %v91 = vld [vmem:[%s1 + $0x4] sm:$0xf]
  %v92 = vld [vmem:[%s1 + $0x8] sm:$0xf]
  %v93 = vld [vmem:[%s1 + $0xc] sm:$0xf]
  %v94 = vld [vmem:[%s2] sm:$0x1]
  %v96 = vlaneseq
  %v97 = vshrl.u32 %v96, 7
  %v98 = vsub.s32 0, %v97
  %v99 = vrot.slane %v94, %v98
  %v105 = vunpack.c.l.b16 %v90
  %v106 = vunpack.c.l.b16 %v91
  %v107 = vunpack.c.l.b16 %v92
  %v108 = vunpack.c.l.b16 %v93
  %v109 = vpack.c.b16 %v106, %v105
  %v110 = vpack.c.b16 %v108, %v107
  %vm113 = vcmask 261120
  %v115 = vsel %vm113, %v71, 0
  %v118 = vsel %vm113, %v72, 0
  %v121 = vsel %vm113, %v73, 0
  %v124 = vsel %vm113, %v74, 0
  %v127 = vsel %vm113, %v75, 0
  %v130 = vsel %vm113, %v76, 0
  %v133 = vsel %vm113, %v77, 0
  %v136 = vsel %vm113, %v78, 0
  %v139 = vsel %vm113, %v79, 0
  %v142 = vsel %vm113, %v80, 0
  %v145 = vsel %vm113, %v81, 0
  %v148 = vsel %vm113, %v82, 0
  %v151 = vsel %vm113, %v83, 0
  %v154 = vsel %vm113, %v84, 0
  %v157 = vsel %vm113, %v85, 0
  %v160 = vsel %vm113, %v86, 0
  %v163 = vsel %vm113, %v87, 0
  %v166 = vsel %vm113, %v88, 0
  %v169 = vsel %vm113, %v89, 0
  %171 = vmatprep.subr.bf16.mxu0 0
  %172 = vmatpush1.bf16.msra.mxu0 %v109
  %173 = vmatprep.subr.bf16.mxu0 0
  %174 = vmatpush1.bf16.msra.mxu0 %v110
  %175 = vmatprep.subr.bf16.mxu0 0
  %176 = vmatpush1.bf16.msra.mxu0 0
  %177 = vmatprep.subr.bf16.mxu0 0
  %178 = vmatpush1.bf16.msra.mxu0 0
  %179 = vmatprep.subr.bf16.mxu0 0
  %180 = vmatpush1.bf16.msra.mxu0 0
  %181 = vmatprep.subr.bf16.mxu0 0
  %182 = vmatpush1.bf16.msra.mxu0 0
  %183 = vmatprep.subr.bf16.mxu0 0
  %184 = vmatpush1.bf16.msra.mxu0 0
  %185 = vmatprep.subr.bf16.mxu0 0
  %186 = vmatpush1.bf16.msra.mxu0 0
  %187 = vmatprep.subr.bf16.mxu0 0
  %188 = vmatpush1.bf16.msra.mxu0 0
  %189 = vmatprep.subr.bf16.mxu0 0
  %190 = vmatpush1.bf16.msra.mxu0 0
  %191 = vmatprep.subr.bf16.mxu0 0
  %192 = vmatpush1.bf16.msra.mxu0 0
  %193 = vmatprep.subr.bf16.mxu0 0
  %194 = vmatpush1.bf16.msra.mxu0 0
  %195 = vmatprep.subr.bf16.mxu0 0
  %196 = vmatpush1.bf16.msra.mxu0 0
  %197 = vmatprep.subr.bf16.mxu0 0
  %198 = vmatpush1.bf16.msra.mxu0 0
  %199 = vmatprep.subr.bf16.mxu0 0
  %200 = vmatpush1.bf16.msra.mxu0 0
  %201 = vmatprep.subr.bf16.mxu0 0
  %202 = vmatpush1.bf16.msra.mxu0 0
  %203 = vmatprep.mubr.bf16.mxu0 0
  %204 = vmatmul.mubr.bf16.gmra.mrb[0].mxu0 %v115
  %v205 = vpop.f32.mrb[0].mxu0
  %v206 = vadd.f32 %v99, %v205
  %v207 = vpop.f32.mrb[0].mxu0
  %v208 = vpop.f32.mrb[0].mxu0
  %v209 = vadd.f32 %v99, %v208
  %v210 = vpop.f32.mrb[0].mxu0
  %211 = vmatprep.mubr.bf16.mxu0 0
  %212 = vmatmul.mubr.bf16.gmra.mrb[0].mxu0 %v118
  %v213 = vpop.f32.mrb[0].mxu0
  %v214 = vadd.f32 %v99, %v213
  %v215 = vpop.f32.mrb[0].mxu0
  %v216 = vpop.f32.mrb[0].mxu0
  %v217 = vadd.f32 %v99, %v216
  %v218 = vpop.f32.mrb[0].mxu0
  %219 = vmatprep.mubr.bf16.mxu0 0
  %220 = vmatmul.mubr.bf16.gmra.mrb[0].mxu0 %v121
  %v221 = vpop.f32.mrb[0].mxu0
  %v222 = vadd.f32 %v99, %v221
  %v223 = vpop.f32.mrb[0].mxu0
  %v224 = vpop.f32.mrb[0].mxu0
  %v225 = vadd.f32 %v99, %v224
  %v226 = vpop.f32.mrb[0].mxu0
  %227 = vmatprep.mubr.bf16.mxu0 0
  %228 = vmatmul.mubr.bf16.gmra.mrb[0].mxu0 %v124
  %v229 = vpop.f32.mrb[0].mxu0
  %v230 = vadd.f32 %v99, %v229
  %v231 = vpop.f32.mrb[0].mxu0
  %v232 = vpop.f32.mrb[0].mxu0
  %v233 = vadd.f32 %v99, %v232
  %v234 = vpop.f32.mrb[0].mxu0
  %235 = vmatprep.mubr.bf16.mxu0 0
  %236 = vmatmul.mubr.bf16.gmra.mrb[0].mxu0 %v127
  %v237 = vpop.f32.mrb[0].mxu0
  %v238 = vadd.f32 %v99, %v237
  %v239 = vpop.f32.mrb[0].mxu0
  %v240 = vpop.f32.mrb[0].mxu0
  %v241 = vadd.f32 %v99, %v240
  %v242 = vpop.f32.mrb[0].mxu0
  %243 = vmatprep.mubr.bf16.mxu0 0
  %244 = vmatmul.mubr.bf16.gmra.mrb[0].mxu0 %v130
  %v245 = vpop.f32.mrb[0].mxu0
  %v246 = vadd.f32 %v99, %v245
  %v247 = vpop.f32.mrb[0].mxu0
  %v248 = vpop.f32.mrb[0].mxu0
  %v249 = vadd.f32 %v99, %v248
  %v250 = vpop.f32.mrb[0].mxu0
  %251 = vmatprep.mubr.bf16.mxu0 0
  %252 = vmatmul.mubr.bf16.gmra.mrb[0].mxu0 %v133
  %v253 = vpop.f32.mrb[0].mxu0
  %v254 = vadd.f32 %v99, %v253
  %v255 = vpop.f32.mrb[0].mxu0
  %v256 = vpop.f32.mrb[0].mxu0
  %v257 = vadd.f32 %v99, %v256
  %v258 = vpop.f32.mrb[0].mxu0
  %259 = vmatprep.mubr.bf16.mxu0 0
  %260 = vmatmul.mubr.bf16.gmra.mrb[0].mxu0 %v136
  %v261 = vpop.f32.mrb[0].mxu0
  %v262 = vadd.f32 %v99, %v261
  %v263 = vpop.f32.mrb[0].mxu0
  %v264 = vpop.f32.mrb[0].mxu0
  %v265 = vadd.f32 %v99, %v264
  %v266 = vpop.f32.mrb[0].mxu0
  %267 = vmatprep.mubr.bf16.mxu0 0
  %268 = vmatmul.mubr.bf16.gmra.mrb[0].mxu0 %v139
  %v269 = vpop.f32.mrb[0].mxu0
  %v270 = vadd.f32 %v99, %v269
  %v271 = vpop.f32.mrb[0].mxu0
  %v272 = vpop.f32.mrb[0].mxu0
  %v273 = vadd.f32 %v99, %v272
  %v274 = vpop.f32.mrb[0].mxu0
  %275 = vmatprep.mubr.bf16.mxu0 0
  %276 = vmatmul.mubr.bf16.gmra.mrb[0].mxu0 %v142
  %v277 = vpop.f32.mrb[0].mxu0
  %v278 = vadd.f32 %v99, %v277
  %v279 = vpop.f32.mrb[0].mxu0
  %v280 = vpop.f32.mrb[0].mxu0
  %v281 = vadd.f32 %v99, %v280
  %v282 = vpop.f32.mrb[0].mxu0
  %283 = vmatprep.mubr.bf16.mxu0 0
  %284 = vmatmul.mubr.bf16.gmra.mrb[0].mxu0 %v145
  %v285 = vpop.f32.mrb[0].mxu0
  %v286 = vadd.f32 %v99, %v285
  %v287 = vpop.f32.mrb[0].mxu0
  %v288 = vpop.f32.mrb[0].mxu0
  %v289 = vadd.f32 %v99, %v288
  %v290 = vpop.f32.mrb[0].mxu0
  %291 = vmatprep.mubr.bf16.mxu0 0
  %292 = vmatmul.mubr.bf16.gmra.mrb[0].mxu0 %v148
  %v293 = vpop.f32.mrb[0].mxu0
  %v294 = vadd.f32 %v99, %v293
  %v295 = vpop.f32.mrb[0].mxu0
  %v296 = vpop.f32.mrb[0].mxu0
  %v297 = vadd.f32 %v99, %v296
  %v298 = vpop.f32.mrb[0].mxu0
  %299 = vmatprep.mubr.bf16.mxu0 0
  %300 = vmatmul.mubr.bf16.gmra.mrb[0].mxu0 %v151
  %v301 = vpop.f32.mrb[0].mxu0
  %v302 = vadd.f32 %v99, %v301
  %v303 = vpop.f32.mrb[0].mxu0
  %v304 = vpop.f32.mrb[0].mxu0
  %v305 = vadd.f32 %v99, %v304
  %v306 = vpop.f32.mrb[0].mxu0
  %307 = vmatprep.mubr.bf16.mxu0 0
  %308 = vmatmul.mubr.bf16.gmra.mrb[0].mxu0 %v154
  %v309 = vpop.f32.mrb[0].mxu0
  %v310 = vadd.f32 %v99, %v309
  %v311 = vpop.f32.mrb[0].mxu0
  %v312 = vpop.f32.mrb[0].mxu0
  %v313 = vadd.f32 %v99, %v312
  %v314 = vpop.f32.mrb[0].mxu0
  %315 = vmatprep.mubr.bf16.mxu0 0
  %316 = vmatmul.mubr.bf16.gmra.mrb[0].mxu0 %v157
  %v317 = vpop.f32.mrb[0].mxu0
  %v318 = vadd.f32 %v99, %v317
  %v319 = vpop.f32.mrb[0].mxu0
  %v320 = vpop.f32.mrb[0].mxu0
  %v321 = vadd.f32 %v99, %v320
  %v322 = vpop.f32.mrb[0].mxu0
  %323 = vmatprep.mubr.bf16.mxu0 0
  %324 = vmatmul.mubr.bf16.gmra.mrb[0].mxu0 %v160
  %v325 = vpop.f32.mrb[0].mxu0
  %v326 = vadd.f32 %v99, %v325
  %v327 = vpop.f32.mrb[0].mxu0
  %v328 = vpop.f32.mrb[0].mxu0
  %v329 = vadd.f32 %v99, %v328
  %v330 = vpop.f32.mrb[0].mxu0
  %331 = vmatprep.mubr.bf16.mxu0 0
  %332 = vmatmul.mubr.bf16.gmra.mrb[0].mxu0 %v163
  %v333 = vpop.f32.mrb[0].mxu0
  %v334 = vadd.f32 %v99, %v333
  %v335 = vpop.f32.mrb[0].mxu0
  %v336 = vpop.f32.mrb[0].mxu0
  %v337 = vadd.f32 %v99, %v336
  %v338 = vpop.f32.mrb[0].mxu0
  %339 = vmatprep.mubr.bf16.mxu0 0
  %340 = vmatmul.mubr.bf16.gmra.mrb[0].mxu0 %v166
  %v341 = vpop.f32.mrb[0].mxu0
  %v342 = vadd.f32 %v99, %v341
  %v343 = vpop.f32.mrb[0].mxu0
  %v344 = vpop.f32.mrb[0].mxu0
  %v345 = vadd.f32 %v99, %v344
  %v346 = vpop.f32.mrb[0].mxu0
  %347 = vmatprep.mubr.bf16.mxu0 0
  %348 = vmatmul.mubr.bf16.gmra.mrb[0].mxu0 %v169
  %v349 = vpop.f32.mrb[0].mxu0
  %v350 = vadd.f32 %v99, %v349
  %v351 = vpop.f32.mrb[0].mxu0
  %v352 = vpop.f32.mrb[0].mxu0
  %v353 = vadd.f32 %v99, %v352
  %v354 = vpop.f32.mrb[0].mxu0
  %355 = vdwg.mxu0
  %v356 = vmax.f32 %v206, 0.0
  %v357 = vmax.f32 %v209, 0.0
  %v358 = vmax.f32 %v214, 0.0
  %v359 = vmax.f32 %v217, 0.0
  %v360 = vmax.f32 %v222, 0.0
  %v361 = vmax.f32 %v225, 0.0
  %v362 = vmax.f32 %v230, 0.0
  %v363 = vmax.f32 %v233, 0.0
  %v364 = vmax.f32 %v238, 0.0
  %v365 = vmax.f32 %v241, 0.0
  %v366 = vmax.f32 %v246, 0.0
  %v367 = vmax.f32 %v249, 0.0
  %v368 = vmax.f32 %v254, 0.0
  %v369 = vmax.f32 %v257, 0.0
  %v370 = vmax.f32 %v262, 0.0
  %v371 = vmax.f32 %v265, 0.0
  %v372 = vmax.f32 %v270, 0.0
  %v373 = vmax.f32 %v273, 0.0
  %v374 = vmax.f32 %v278, 0.0
  %v375 = vmax.f32 %v281, 0.0
  %v376 = vmax.f32 %v286, 0.0
  %v377 = vmax.f32 %v289, 0.0
  %v378 = vmax.f32 %v294, 0.0
  %v379 = vmax.f32 %v297, 0.0
  %v380 = vmax.f32 %v302, 0.0
  %v381 = vmax.f32 %v305, 0.0
  %v382 = vmax.f32 %v310, 0.0
  %v383 = vmax.f32 %v313, 0.0
  %v384 = vmax.f32 %v318, 0.0
  %v385 = vmax.f32 %v321, 0.0
  %v386 = vmax.f32 %v326, 0.0
  %v387 = vmax.f32 %v329, 0.0
  %v388 = vmax.f32 %v334, 0.0
  %v389 = vmax.f32 %v337, 0.0
  %v390 = vmax.f32 %v342, 0.0
  %v391 = vmax.f32 %v345, 0.0
  %v392 = vmax.f32 %v350, 0.0
  %v393 = vmax.f32 %v353, 0.0
  %v394 = vpack.c.bf16 %v357, %v356
  %v395 = vpack.c.bf16 %v359, %v358
  %v396 = vpack.c.bf16 %v361, %v360
  %v397 = vpack.c.bf16 %v363, %v362
  %v398 = vpack.c.bf16 %v365, %v364
  %v399 = vpack.c.bf16 %v367, %v366
  %v400 = vpack.c.bf16 %v369, %v368
  %v401 = vpack.c.bf16 %v371, %v370
  %v402 = vpack.c.bf16 %v373, %v372
  %v403 = vpack.c.bf16 %v375, %v374
  %v404 = vpack.c.bf16 %v377, %v376
  %v405 = vpack.c.bf16 %v379, %v378
  %v406 = vpack.c.bf16 %v381, %v380
  %v407 = vpack.c.bf16 %v383, %v382
  %v408 = vpack.c.bf16 %v385, %v384
  %v409 = vpack.c.bf16 %v387, %v386
  %v410 = vpack.c.bf16 %v389, %v388
  %v411 = vpack.c.bf16 %v391, %v390
  %v412 = vpack.c.bf16 %v393, %v392
  %v413 = vld [vmem:[%s3] sm:$0xf]
  %v414 = vld [vmem:[%s3 + $0x4] sm:$0xf]
  %v415 = vld [vmem:[%s3 + $0x8] sm:$0xf]
  %v416 = vld [vmem:[%s3 + $0xc] sm:$0xf]
  %v417 = vld [vmem:[%s3 + $0x10] sm:$0xf]
  %v418 = vld [vmem:[%s3 + $0x14] sm:$0xf]
  %v419 = vld [vmem:[%s3 + $0x18] sm:$0xf]
  %v420 = vld [vmem:[%s3 + $0x1c] sm:$0xf]
  %v421 = vld [vmem:[%s4] sm:$0x1]
  %v423 = vlaneseq
  %v424 = vshrl.u32 %v423, 7
  %v425 = vsub.s32 0, %v424
  %v426 = vrot.slane %v421, %v425
  %v436 = vunpack.c.l.b16 %v413
  %v437 = vunpack.c.l.b16 %v414
  %v438 = vunpack.c.l.b16 %v415
  %v439 = vunpack.c.l.b16 %v416
  %v440 = vunpack.c.l.b16 %v417
  %v441 = vunpack.c.l.b16 %v418
  %v442 = vunpack.c.l.b16 %v419
  %v443 = vunpack.c.l.b16 %v420
  %v444 = vpack.c.b16 %v437, %v436
  %v445 = vpack.c.b16 %v439, %v438
  %v446 = vpack.c.b16 %v441, %v440
  %v447 = vpack.c.b16 %v443, %v442
  %vm452 = vcmask 523264
  %v454 = vsel %vm452, %v394, 0
  %v457 = vsel %vm452, %v395, 0
  %v460 = vsel %vm452, %v396, 0
  %v463 = vsel %vm452, %v397, 0
  %v466 = vsel %vm452, %v398, 0
  %v469 = vsel %vm452, %v399, 0
  %v472 = vsel %vm452, %v400, 0
  %v475 = vsel %vm452, %v401, 0
  %v478 = vsel %vm452, %v402, 0
  %v481 = vsel %vm452, %v403, 0
  %v484 = vsel %vm452, %v404, 0
  %v487 = vsel %vm452, %v405, 0
  %v490 = vsel %vm452, %v406, 0
  %v493 = vsel %vm452, %v407, 0
  %v496 = vsel %vm452, %v408, 0
  %v499 = vsel %vm452, %v409, 0
  %v502 = vsel %vm452, %v410, 0
  %v505 = vsel %vm452, %v411, 0
  %v508 = vsel %vm452, %v412, 0
  %510 = vmatprep.subr.bf16.mxu0 0
  %511 = vmatpush1.bf16.msra.mxu0 %v444
  %512 = vmatprep.subr.bf16.mxu0 0
  %513 = vmatpush1.bf16.msra.mxu0 %v445
  %514 = vmatprep.subr.bf16.mxu0 0
  %515 = vmatpush1.bf16.msra.mxu0 %v446
  %516 = vmatprep.subr.bf16.mxu0 0
  %517 = vmatpush1.bf16.msra.mxu0 %v447
  %518 = vmatprep.subr.bf16.mxu0 0
  %519 = vmatpush1.bf16.msra.mxu0 0
  %520 = vmatprep.subr.bf16.mxu0 0
  %521 = vmatpush1.bf16.msra.mxu0 0
  %522 = vmatprep.subr.bf16.mxu0 0
  %523 = vmatpush1.bf16.msra.mxu0 0
  %524 = vmatprep.subr.bf16.mxu0 0
  %525 = vmatpush1.bf16.msra.mxu0 0
  %526 = vmatprep.subr.bf16.mxu0 0
  %527 = vmatpush1.bf16.msra.mxu0 0
  %528 = vmatprep.subr.bf16.mxu0 0
  %529 = vmatpush1.bf16.msra.mxu0 0
  %530 = vmatprep.subr.bf16.mxu0 0
  %531 = vmatpush1.bf16.msra.mxu0 0
  %532 = vmatprep.subr.bf16.mxu0 0
  %533 = vmatpush1.bf16.msra.mxu0 0
  %534 = vmatprep.subr.bf16.mxu0 0
  %535 = vmatpush1.bf16.msra.mxu0 0
  %536 = vmatprep.subr.bf16.mxu0 0
  %537 = vmatpush1.bf16.msra.mxu0 0
  %538 = vmatprep.subr.bf16.mxu0 0
  %539 = vmatpush1.bf16.msra.mxu0 0
  %540 = vmatprep.subr.bf16.mxu0 0
  %541 = vmatpush1.bf16.msra.mxu0 0
  %542 = vmatprep.mubr.bf16.mxu0 0
  %543 = vmatmul.mubr.bf16.gmra.mrb[0].mxu0 %v454
  %v544 = vpop.f32.mrb[0].mxu0
  %v545 = vadd.f32 %v426, %v544
  %v546 = vpop.f32.mrb[0].mxu0
  %v547 = vpop.f32.mrb[0].mxu0
  %v548 = vadd.f32 %v426, %v547
  %v549 = vpop.f32.mrb[0].mxu0
  %550 = vmatprep.mubr.bf16.mxu0 0
  %551 = vmatmul.mubr.bf16.gmra.mrb[0].mxu0 %v457
  %v552 = vpop.f32.mrb[0].mxu0
  %v553 = vadd.f32 %v426, %v552
  %v554 = vpop.f32.mrb[0].mxu0
  %v555 = vpop.f32.mrb[0].mxu0
  %v556 = vadd.f32 %v426, %v555
  %v557 = vpop.f32.mrb[0].mxu0
  %558 = vmatprep.mubr.bf16.mxu0 0
  %559 = vmatmul.mubr.bf16.gmra.mrb[0].mxu0 %v460
  %v560 = vpop.f32.mrb[0].mxu0
  %v561 = vadd.f32 %v426, %v560
  %v562 = vpop.f32.mrb[0].mxu0
  %v563 = vpop.f32.mrb[0].mxu0
  %v564 = vadd.f32 %v426, %v563
  %v565 = vpop.f32.mrb[0].mxu0
  %566 = vmatprep.mubr.bf16.mxu0 0
  %567 = vmatmul.mubr.bf16.gmra.mrb[0].mxu0 %v463
  %v568 = vpop.f32.mrb[0].mxu0
  %v569 = vadd.f32 %v426, %v568
  %v570 = vpop.f32.mrb[0].mxu0
  %v571 = vpop.f32.mrb[0].mxu0
  %v572 = vadd.f32 %v426, %v571
  %v573 = vpop.f32.mrb[0].mxu0
  %574 = vmatprep.mubr.bf16.mxu0 0
  %575 = vmatmul.mubr.bf16.gmra.mrb[0].mxu0 %v466
  %v576 = vpop.f32.mrb[0].mxu0
  %v577 = vadd.f32 %v426, %v576
  %v578 = vpop.f32.mrb[0].mxu0
  %v579 = vpop.f32.mrb[0].mxu0
  %v580 = vadd.f32 %v426, %v579
  %v581 = vpop.f32.mrb[0].mxu0
  %582 = vmatprep.mubr.bf16.mxu0 0
  %583 = vmatmul.mubr.bf16.gmra.mrb[0].mxu0 %v469
  %v584 = vpop.f32.mrb[0].mxu0
  %v585 = vadd.f32 %v426, %v584
  %v586 = vpop.f32.mrb[0].mxu0
  %v587 = vpop.f32.mrb[0].mxu0
  %v588 = vadd.f32 %v426, %v587
  %v589 = vpop.f32.mrb[0].mxu0
  %590 = vmatprep.mubr.bf16.mxu0 0
  %591 = vmatmul.mubr.bf16.gmra.mrb[0].mxu0 %v472
  %v592 = vpop.f32.mrb[0].mxu0
  %v593 = vadd.f32 %v426, %v592
  %v594 = vpop.f32.mrb[0].mxu0
  %v595 = vpop.f32.mrb[0].mxu0
  %v596 = vadd.f32 %v426, %v595
  %v597 = vpop.f32.mrb[0].mxu0
  %598 = vmatprep.mubr.bf16.mxu0 0
  %599 = vmatmul.mubr.bf16.gmra.mrb[0].mxu0 %v475
  %v600 = vpop.f32.mrb[0].mxu0
  %v601 = vadd.f32 %v426, %v600
  %v602 = vpop.f32.mrb[0].mxu0
  %v603 = vpop.f32.mrb[0].mxu0
  %v604 = vadd.f32 %v426, %v603
  %v605 = vpop.f32.mrb[0].mxu0
  %606 = vmatprep.mubr.bf16.mxu0 0
  %607 = vmatmul.mubr.bf16.gmra.mrb[0].mxu0 %v478
  %v608 = vpop.f32.mrb[0].mxu0
  %v609 = vadd.f32 %v426, %v608
  %v610 = vpop.f32.mrb[0].mxu0
  %v611 = vpop.f32.mrb[0].mxu0
  %v612 = vadd.f32 %v426, %v611
  %v613 = vpop.f32.mrb[0].mxu0
  %614 = vmatprep.mubr.bf16.mxu0 0
  %615 = vmatmul.mubr.bf16.gmra.mrb[0].mxu0 %v481
  %v616 = vpop.f32.mrb[0].mxu0
  %v617 = vadd.f32 %v426, %v616
  %v618 = vpop.f32.mrb[0].mxu0
  %v619 = vpop.f32.mrb[0].mxu0
  %v620 = vadd.f32 %v426, %v619
  %v621 = vpop.f32.mrb[0].mxu0
  %622 = vmatprep.mubr.bf16.mxu0 0
  %623 = vmatmul.mubr.bf16.gmra.mrb[0].mxu0 %v484
  %v624 = vpop.f32.mrb[0].mxu0
  %v625 = vadd.f32 %v426, %v624
  %v626 = vpop.f32.mrb[0].mxu0
  %v627 = vpop.f32.mrb[0].mxu0
  %v628 = vadd.f32 %v426, %v627
  %v629 = vpop.f32.mrb[0].mxu0
  %630 = vmatprep.mubr.bf16.mxu0 0
  %631 = vmatmul.mubr.bf16.gmra.mrb[0].mxu0 %v487
  %v632 = vpop.f32.mrb[0].mxu0
  %v633 = vadd.f32 %v426, %v632
  %v634 = vpop.f32.mrb[0].mxu0
  %v635 = vpop.f32.mrb[0].mxu0
  %v636 = vadd.f32 %v426, %v635
  %v637 = vpop.f32.mrb[0].mxu0
  %638 = vmatprep.mubr.bf16.mxu0 0
  %639 = vmatmul.mubr.bf16.gmra.mrb[0].mxu0 %v490
  %v640 = vpop.f32.mrb[0].mxu0
  %v641 = vadd.f32 %v426, %v640
  %v642 = vpop.f32.mrb[0].mxu0
  %v643 = vpop.f32.mrb[0].mxu0
  %v644 = vadd.f32 %v426, %v643
  %v645 = vpop.f32.mrb[0].mxu0
  %646 = vmatprep.mubr.bf16.mxu0 0
  %647 = vmatmul.mubr.bf16.gmra.mrb[0].mxu0 %v493
  %v648 = vpop.f32.mrb[0].mxu0
  %v649 = vadd.f32 %v426, %v648
  %v650 = vpop.f32.mrb[0].mxu0
  %v651 = vpop.f32.mrb[0].mxu0
  %v652 = vadd.f32 %v426, %v651
  %v653 = vpop.f32.mrb[0].mxu0
  %654 = vmatprep.mubr.bf16.mxu0 0
  %655 = vmatmul.mubr.bf16.gmra.mrb[0].mxu0 %v496
  %v656 = vpop.f32.mrb[0].mxu0
  %v657 = vadd.f32 %v426, %v656
  %v658 = vpop.f32.mrb[0].mxu0
  %v659 = vpop.f32.mrb[0].mxu0
  %v660 = vadd.f32 %v426, %v659
  %v661 = vpop.f32.mrb[0].mxu0
  %662 = vmatprep.mubr.bf16.mxu0 0
  %663 = vmatmul.mubr.bf16.gmra.mrb[0].mxu0 %v499
  %v664 = vpop.f32.mrb[0].mxu0
  %v665 = vadd.f32 %v426, %v664
  %v666 = vpop.f32.mrb[0].mxu0
  %v667 = vpop.f32.mrb[0].mxu0
  %v668 = vadd.f32 %v426, %v667
  %v669 = vpop.f32.mrb[0].mxu0
  %670 = vmatprep.mubr.bf16.mxu0 0
  %671 = vmatmul.mubr.bf16.gmra.mrb[0].mxu0 %v502
  %v672 = vpop.f32.mrb[0].mxu0
  %v673 = vadd.f32 %v426, %v672
  %v674 = vpop.f32.mrb[0].mxu0
  %v675 = vpop.f32.mrb[0].mxu0
  %v676 = vadd.f32 %v426, %v675
  %v677 = vpop.f32.mrb[0].mxu0
  %678 = vmatprep.mubr.bf16.mxu0 0
  %679 = vmatmul.mubr.bf16.gmra.mrb[0].mxu0 %v505
  %v680 = vpop.f32.mrb[0].mxu0
  %v681 = vadd.f32 %v426, %v680
  %v682 = vpop.f32.mrb[0].mxu0
  %v683 = vpop.f32.mrb[0].mxu0
  %v684 = vadd.f32 %v426, %v683
  %v685 = vpop.f32.mrb[0].mxu0
  %686 = vmatprep.mubr.bf16.mxu0 0
  %687 = vmatmul.mubr.bf16.gmra.mrb[0].mxu0 %v508
  %v688 = vpop.f32.mrb[0].mxu0
  %v689 = vadd.f32 %v426, %v688
  %v690 = vpop.f32.mrb[0].mxu0
  %v691 = vpop.f32.mrb[0].mxu0
  %v692 = vadd.f32 %v426, %v691
  %v693 = vpop.f32.mrb[0].mxu0
  %694 = vdwg.mxu0
  %v695 = vmax.f32 %v545, 0.0
  %v696 = vmax.f32 %v548, 0.0
  %v697 = vmax.f32 %v553, 0.0
  %v698 = vmax.f32 %v556, 0.0
  %v699 = vmax.f32 %v561, 0.0
  %v700 = vmax.f32 %v564, 0.0
  %v701 = vmax.f32 %v569, 0.0
  %v702 = vmax.f32 %v572, 0.0
  %v703 = vmax.f32 %v577, 0.0
  %v704 = vmax.f32 %v580, 0.0
  %v705 = vmax.f32 %v585, 0.0
  %v706 = vmax.f32 %v588, 0.0
  %v707 = vmax.f32 %v593, 0.0
  %v708 = vmax.f32 %v596, 0.0
  %v709 = vmax.f32 %v601, 0.0
  %v710 = vmax.f32 %v604, 0.0
  %v711 = vmax.f32 %v609, 0.0
  %v712 = vmax.f32 %v612, 0.0
  %v713 = vmax.f32 %v617, 0.0
  %v714 = vmax.f32 %v620, 0.0
  %v715 = vmax.f32 %v625, 0.0
  %v716 = vmax.f32 %v628, 0.0
  %v717 = vmax.f32 %v633, 0.0
  %v718 = vmax.f32 %v636, 0.0
  %v719 = vmax.f32 %v641, 0.0
  %v720 = vmax.f32 %v644, 0.0
  %v721 = vmax.f32 %v649, 0.0
  %v722 = vmax.f32 %v652, 0.0
  %v723 = vmax.f32 %v657, 0.0
  %v724 = vmax.f32 %v660, 0.0
  %v725 = vmax.f32 %v665, 0.0
  %v726 = vmax.f32 %v668, 0.0
  %v727 = vmax.f32 %v673, 0.0
  %v728 = vmax.f32 %v676, 0.0
  %v729 = vmax.f32 %v681, 0.0
  %v730 = vmax.f32 %v684, 0.0
  %v731 = vmax.f32 %v689, 0.0
  %v732 = vmax.f32 %v692, 0.0
  %v733 = vpack.c.bf16 %v696, %v695
  %v734 = vpack.c.bf16 %v698, %v697
  %v735 = vpack.c.bf16 %v700, %v699
  %v736 = vpack.c.bf16 %v702, %v701
  %v737 = vpack.c.bf16 %v704, %v703
  %v738 = vpack.c.bf16 %v706, %v705
  %v739 = vpack.c.bf16 %v708, %v707
  %v740 = vpack.c.bf16 %v710, %v709
  %v741 = vpack.c.bf16 %v712, %v711
  %v742 = vpack.c.bf16 %v714, %v713
  %v743 = vpack.c.bf16 %v716, %v715
  %v744 = vpack.c.bf16 %v718, %v717
  %v745 = vpack.c.bf16 %v720, %v719
  %v746 = vpack.c.bf16 %v722, %v721
  %v747 = vpack.c.bf16 %v724, %v723
  %v748 = vpack.c.bf16 %v726, %v725
  %v749 = vpack.c.bf16 %v728, %v727
  %v750 = vpack.c.bf16 %v730, %v729
  %v751 = vpack.c.bf16 %v732, %v731
  %v752 = vld [vmem:[%s5] sm:$0xf]
  %v753 = vld [vmem:[%s5 + $0x4] sm:$0xf]
  %v754 = vld [vmem:[%s5 + $0x8] sm:$0xf]
  %v755 = vld [vmem:[%s5 + $0xc] sm:$0xf]
  %v756 = vld [vmem:[%s5 + $0x10] sm:$0xf]
  %v757 = vld [vmem:[%s5 + $0x14] sm:$0xf]
  %v758 = vld [vmem:[%s5 + $0x18] sm:$0xf]
  %v759 = vld [vmem:[%s5 + $0x1c] sm:$0xf]
  %v760 = vld [vmem:[%s6] sm:$0x1]
  %v762 = vlaneseq
  %v763 = vshrl.u32 %v762, 7
  %v764 = vsub.s32 0, %v763
  %v765 = vrot.slane %v760, %v764
  %v775 = vunpack.c.l.b16 %v752
  %v776 = vunpack.c.l.b16 %v753
  %v777 = vunpack.c.l.b16 %v754
  %v778 = vunpack.c.l.b16 %v755
  %v779 = vunpack.c.l.b16 %v756
  %v780 = vunpack.c.l.b16 %v757
  %v781 = vunpack.c.l.b16 %v758
  %v782 = vunpack.c.l.b16 %v759
  %v783 = vpack.c.b16 %v776, %v775
  %v784 = vpack.c.b16 %v778, %v777
  %v785 = vpack.c.b16 %v780, %v779
  %v786 = vpack.c.b16 %v782, %v781
  %v792 = vsel %vm452, %v733, 0
  %v795 = vsel %vm452, %v734, 0
  %v798 = vsel %vm452, %v735, 0
  %v801 = vsel %vm452, %v736, 0
  %v804 = vsel %vm452, %v737, 0
  %v807 = vsel %vm452, %v738, 0
  %v810 = vsel %vm452, %v739, 0
  %v813 = vsel %vm452, %v740, 0
  %v816 = vsel %vm452, %v741, 0
  %v819 = vsel %vm452, %v742, 0
  %v822 = vsel %vm452, %v743, 0
  %v825 = vsel %vm452, %v744, 0
  %v828 = vsel %vm452, %v745, 0
  %v831 = vsel %vm452, %v746, 0
  %v834 = vsel %vm452, %v747, 0
  %v837 = vsel %vm452, %v748, 0
  %v840 = vsel %vm452, %v749, 0
  %v843 = vsel %vm452, %v750, 0
  %v846 = vsel %vm452, %v751, 0
  %848 = vmatprep.subr.bf16.mxu0 0
  %849 = vmatpush1.bf16.msra.mxu0 %v783
  %850 = vmatprep.subr.bf16.mxu0 0
  %851 = vmatpush1.bf16.msra.mxu0 %v784
  %852 = vmatprep.subr.bf16.mxu0 0
  %853 = vmatpush1.bf16.msra.mxu0 %v785
  %854 = vmatprep.subr.bf16.mxu0 0
  %855 = vmatpush1.bf16.msra.mxu0 %v786
  %856 = vmatprep.subr.bf16.mxu0 0
  %857 = vmatpush1.bf16.msra.mxu0 0
  %858 = vmatprep.subr.bf16.mxu0 0
  %859 = vmatpush1.bf16.msra.mxu0 0
  %860 = vmatprep.subr.bf16.mxu0 0
  %861 = vmatpush1.bf16.msra.mxu0 0
  %862 = vmatprep.subr.bf16.mxu0 0
  %863 = vmatpush1.bf16.msra.mxu0 0
  %864 = vmatprep.subr.bf16.mxu0 0
  %865 = vmatpush1.bf16.msra.mxu0 0
  %866 = vmatprep.subr.bf16.mxu0 0
  %867 = vmatpush1.bf16.msra.mxu0 0
  %868 = vmatprep.subr.bf16.mxu0 0
  %869 = vmatpush1.bf16.msra.mxu0 0
  %870 = vmatprep.subr.bf16.mxu0 0
  %871 = vmatpush1.bf16.msra.mxu0 0
  %872 = vmatprep.subr.bf16.mxu0 0
  %873 = vmatpush1.bf16.msra.mxu0 0
  %874 = vmatprep.subr.bf16.mxu0 0
  %875 = vmatpush1.bf16.msra.mxu0 0
  %876 = vmatprep.subr.bf16.mxu0 0
  %877 = vmatpush1.bf16.msra.mxu0 0
  %878 = vmatprep.subr.bf16.mxu0 0
  %879 = vmatpush1.bf16.msra.mxu0 0
  %880 = vmatprep.mubr.bf16.mxu0 0
  %881 = vmatmul.mubr.bf16.gmra.mrb[0].mxu0 %v792
  %v882 = vpop.f32.mrb[0].mxu0
  %v883 = vadd.f32 %v765, %v882
  %v884 = vpop.f32.mrb[0].mxu0
  %v885 = vpop.f32.mrb[0].mxu0
  %v886 = vadd.f32 %v765, %v885
  %v887 = vpop.f32.mrb[0].mxu0
  %888 = vmatprep.mubr.bf16.mxu0 0
  %889 = vmatmul.mubr.bf16.gmra.mrb[0].mxu0 %v795
  %v890 = vpop.f32.mrb[0].mxu0
  %v891 = vadd.f32 %v765, %v890
  %v892 = vpop.f32.mrb[0].mxu0
  %v893 = vpop.f32.mrb[0].mxu0
  %v894 = vadd.f32 %v765, %v893
  %v895 = vpop.f32.mrb[0].mxu0
  %896 = vmatprep.mubr.bf16.mxu0 0
  %897 = vmatmul.mubr.bf16.gmra.mrb[0].mxu0 %v798
  %v898 = vpop.f32.mrb[0].mxu0
  %v899 = vadd.f32 %v765, %v898
  %v900 = vpop.f32.mrb[0].mxu0
  %v901 = vpop.f32.mrb[0].mxu0
  %v902 = vadd.f32 %v765, %v901
  %v903 = vpop.f32.mrb[0].mxu0
  %904 = vmatprep.mubr.bf16.mxu0 0
  %905 = vmatmul.mubr.bf16.gmra.mrb[0].mxu0 %v801
  %v906 = vpop.f32.mrb[0].mxu0
  %v907 = vadd.f32 %v765, %v906
  %v908 = vpop.f32.mrb[0].mxu0
  %v909 = vpop.f32.mrb[0].mxu0
  %v910 = vadd.f32 %v765, %v909
  %v911 = vpop.f32.mrb[0].mxu0
  %912 = vmatprep.mubr.bf16.mxu0 0
  %913 = vmatmul.mubr.bf16.gmra.mrb[0].mxu0 %v804
  %v914 = vpop.f32.mrb[0].mxu0
  %v915 = vadd.f32 %v765, %v914
  %v916 = vpop.f32.mrb[0].mxu0
  %v917 = vpop.f32.mrb[0].mxu0
  %v918 = vadd.f32 %v765, %v917
  %v919 = vpop.f32.mrb[0].mxu0
  %920 = vmatprep.mubr.bf16.mxu0 0
  %921 = vmatmul.mubr.bf16.gmra.mrb[0].mxu0 %v807
  %v922 = vpop.f32.mrb[0].mxu0
  %v923 = vadd.f32 %v765, %v922
  %v924 = vpop.f32.mrb[0].mxu0
  %v925 = vpop.f32.mrb[0].mxu0
  %v926 = vadd.f32 %v765, %v925
  %v927 = vpop.f32.mrb[0].mxu0
  %928 = vmatprep.mubr.bf16.mxu0 0
  %929 = vmatmul.mubr.bf16.gmra.mrb[0].mxu0 %v810
  %v930 = vpop.f32.mrb[0].mxu0
  %v931 = vadd.f32 %v765, %v930
  %v932 = vpop.f32.mrb[0].mxu0
  %v933 = vpop.f32.mrb[0].mxu0
  %v934 = vadd.f32 %v765, %v933
  %v935 = vpop.f32.mrb[0].mxu0
  %936 = vmatprep.mubr.bf16.mxu0 0
  %937 = vmatmul.mubr.bf16.gmra.mrb[0].mxu0 %v813
  %v938 = vpop.f32.mrb[0].mxu0
  %v939 = vadd.f32 %v765, %v938
  %v940 = vpop.f32.mrb[0].mxu0
  %v941 = vpop.f32.mrb[0].mxu0
  %v942 = vadd.f32 %v765, %v941
  %v943 = vpop.f32.mrb[0].mxu0
  %944 = vmatprep.mubr.bf16.mxu0 0
  %945 = vmatmul.mubr.bf16.gmra.mrb[0].mxu0 %v816
  %v946 = vpop.f32.mrb[0].mxu0
  %v947 = vadd.f32 %v765, %v946
  %v948 = vpop.f32.mrb[0].mxu0
  %v949 = vpop.f32.mrb[0].mxu0
  %v950 = vadd.f32 %v765, %v949
  %v951 = vpop.f32.mrb[0].mxu0
  %952 = vmatprep.mubr.bf16.mxu0 0
  %953 = vmatmul.mubr.bf16.gmra.mrb[0].mxu0 %v819
  %v954 = vpop.f32.mrb[0].mxu0
  %v955 = vadd.f32 %v765, %v954
  %v956 = vpop.f32.mrb[0].mxu0
  %v957 = vpop.f32.mrb[0].mxu0
  %v958 = vadd.f32 %v765, %v957
  %v959 = vpop.f32.mrb[0].mxu0
  %960 = vmatprep.mubr.bf16.mxu0 0
  %961 = vmatmul.mubr.bf16.gmra.mrb[0].mxu0 %v822
  %v962 = vpop.f32.mrb[0].mxu0
  %v963 = vadd.f32 %v765, %v962
  %v964 = vpop.f32.mrb[0].mxu0
  %v965 = vpop.f32.mrb[0].mxu0
  %v966 = vadd.f32 %v765, %v965
  %v967 = vpop.f32.mrb[0].mxu0
  %968 = vmatprep.mubr.bf16.mxu0 0
  %969 = vmatmul.mubr.bf16.gmra.mrb[0].mxu0 %v825
  %v970 = vpop.f32.mrb[0].mxu0
  %v971 = vadd.f32 %v765, %v970
  %v972 = vpop.f32.mrb[0].mxu0
  %v973 = vpop.f32.mrb[0].mxu0
  %v974 = vadd.f32 %v765, %v973
  %v975 = vpop.f32.mrb[0].mxu0
  %976 = vmatprep.mubr.bf16.mxu0 0
  %977 = vmatmul.mubr.bf16.gmra.mrb[0].mxu0 %v828
  %v978 = vpop.f32.mrb[0].mxu0
  %v979 = vadd.f32 %v765, %v978
  %v980 = vpop.f32.mrb[0].mxu0
  %v981 = vpop.f32.mrb[0].mxu0
  %v982 = vadd.f32 %v765, %v981
  %v983 = vpop.f32.mrb[0].mxu0
  %984 = vmatprep.mubr.bf16.mxu0 0
  %985 = vmatmul.mubr.bf16.gmra.mrb[0].mxu0 %v831
  %v986 = vpop.f32.mrb[0].mxu0
  %v987 = vadd.f32 %v765, %v986
  %v988 = vpop.f32.mrb[0].mxu0
  %v989 = vpop.f32.mrb[0].mxu0
  %v990 = vadd.f32 %v765, %v989
  %v991 = vpop.f32.mrb[0].mxu0
  %992 = vmatprep.mubr.bf16.mxu0 0
  %993 = vmatmul.mubr.bf16.gmra.mrb[0].mxu0 %v834
  %v994 = vpop.f32.mrb[0].mxu0
  %v995 = vadd.f32 %v765, %v994
  %v996 = vpop.f32.mrb[0].mxu0
  %v997 = vpop.f32.mrb[0].mxu0
  %v998 = vadd.f32 %v765, %v997
  %v999 = vpop.f32.mrb[0].mxu0
  %1000 = vmatprep.mubr.bf16.mxu0 0
  %1001 = vmatmul.mubr.bf16.gmra.mrb[0].mxu0 %v837
  %v1002 = vpop.f32.mrb[0].mxu0
  %v1003 = vadd.f32 %v765, %v1002
  %v1004 = vpop.f32.mrb[0].mxu0
  %v1005 = vpop.f32.mrb[0].mxu0
  %v1006 = vadd.f32 %v765, %v1005
  %v1007 = vpop.f32.mrb[0].mxu0
  %1008 = vmatprep.mubr.bf16.mxu0 0
  %1009 = vmatmul.mubr.bf16.gmra.mrb[0].mxu0 %v840
  %v1010 = vpop.f32.mrb[0].mxu0
  %v1011 = vadd.f32 %v765, %v1010
  %v1012 = vpop.f32.mrb[0].mxu0
  %v1013 = vpop.f32.mrb[0].mxu0
  %v1014 = vadd.f32 %v765, %v1013
  %v1015 = vpop.f32.mrb[0].mxu0
  %1016 = vmatprep.mubr.bf16.mxu0 0
  %1017 = vmatmul.mubr.bf16.gmra.mrb[0].mxu0 %v843
  %v1018 = vpop.f32.mrb[0].mxu0
  %v1019 = vadd.f32 %v765, %v1018
  %v1020 = vpop.f32.mrb[0].mxu0
  %v1021 = vpop.f32.mrb[0].mxu0
  %v1022 = vadd.f32 %v765, %v1021
  %v1023 = vpop.f32.mrb[0].mxu0
  %1024 = vmatprep.mubr.bf16.mxu0 0
  %1025 = vmatmul.mubr.bf16.gmra.mrb[0].mxu0 %v846
  %v1026 = vpop.f32.mrb[0].mxu0
  %v1027 = vadd.f32 %v765, %v1026
  %v1028 = vpop.f32.mrb[0].mxu0
  %v1029 = vpop.f32.mrb[0].mxu0
  %v1030 = vadd.f32 %v765, %v1029
  %v1031 = vpop.f32.mrb[0].mxu0
  %1032 = vdwg.mxu0
  %v1033 = vmax.f32 %v883, 0.0
  %v1034 = vmax.f32 %v886, 0.0
  %v1035 = vmax.f32 %v891, 0.0
  %v1036 = vmax.f32 %v894, 0.0
  %v1037 = vmax.f32 %v899, 0.0
  %v1038 = vmax.f32 %v902, 0.0
  %v1039 = vmax.f32 %v907, 0.0
  %v1040 = vmax.f32 %v910, 0.0
  %v1041 = vmax.f32 %v915, 0.0
  %v1042 = vmax.f32 %v918, 0.0
  %v1043 = vmax.f32 %v923, 0.0
  %v1044 = vmax.f32 %v926, 0.0
  %v1045 = vmax.f32 %v931, 0.0
  %v1046 = vmax.f32 %v934, 0.0
  %v1047 = vmax.f32 %v939, 0.0
  %v1048 = vmax.f32 %v942, 0.0
  %v1049 = vmax.f32 %v947, 0.0
  %v1050 = vmax.f32 %v950, 0.0
  %v1051 = vmax.f32 %v955, 0.0
  %v1052 = vmax.f32 %v958, 0.0
  %v1053 = vmax.f32 %v963, 0.0
  %v1054 = vmax.f32 %v966, 0.0
  %v1055 = vmax.f32 %v971, 0.0
  %v1056 = vmax.f32 %v974, 0.0
  %v1057 = vmax.f32 %v979, 0.0
  %v1058 = vmax.f32 %v982, 0.0
  %v1059 = vmax.f32 %v987, 0.0
  %v1060 = vmax.f32 %v990, 0.0
  %v1061 = vmax.f32 %v995, 0.0
  %v1062 = vmax.f32 %v998, 0.0
  %v1063 = vmax.f32 %v1003, 0.0
  %v1064 = vmax.f32 %v1006, 0.0
  %v1065 = vmax.f32 %v1011, 0.0
  %v1066 = vmax.f32 %v1014, 0.0
  %v1067 = vmax.f32 %v1019, 0.0
  %v1068 = vmax.f32 %v1022, 0.0
  %v1069 = vmax.f32 %v1027, 0.0
  %v1070 = vmax.f32 %v1030, 0.0
  %v1071 = vpack.c.bf16 %v1034, %v1033
  %v1072 = vpack.c.bf16 %v1036, %v1035
  %v1073 = vpack.c.bf16 %v1038, %v1037
  %v1074 = vpack.c.bf16 %v1040, %v1039
  %v1075 = vpack.c.bf16 %v1042, %v1041
  %v1076 = vpack.c.bf16 %v1044, %v1043
  %v1077 = vpack.c.bf16 %v1046, %v1045
  %v1078 = vpack.c.bf16 %v1048, %v1047
  %v1079 = vpack.c.bf16 %v1050, %v1049
  %v1080 = vpack.c.bf16 %v1052, %v1051
  %v1081 = vpack.c.bf16 %v1054, %v1053
  %v1082 = vpack.c.bf16 %v1056, %v1055
  %v1083 = vpack.c.bf16 %v1058, %v1057
  %v1084 = vpack.c.bf16 %v1060, %v1059
  %v1085 = vpack.c.bf16 %v1062, %v1061
  %v1086 = vpack.c.bf16 %v1064, %v1063
  %v1087 = vpack.c.bf16 %v1066, %v1065
  %v1088 = vpack.c.bf16 %v1068, %v1067
  %v1089 = vpack.c.bf16 %v1070, %v1069
  %v1090 = vld [vmem:[%s7] sm:$0xf]
  %v1091 = vld [vmem:[%s7 + $0x4] sm:$0xf]
  %v1092 = vld [vmem:[%s7 + $0x8] sm:$0xf]
  %v1093 = vld [vmem:[%s7 + $0xc] sm:$0xf]
  %v1094 = vld [vmem:[%s8] sm:$0x1]
  %v1096 = vlaneseq
  %v1097 = vshrl.u32 %v1096, 7
  %v1098 = vsub.s32 0, %v1097
  %v1099 = vrot.slane %v1094, %v1098
  %v1105 = vunpack.c.l.b16 %v1090
  %v1106 = vunpack.c.l.b16 %v1091
  %v1107 = vunpack.c.l.b16 %v1092
  %v1108 = vunpack.c.l.b16 %v1093
  %v1109 = vpack.c.b16 %v1106, %v1105
  %v1110 = vpack.c.b16 %v1108, %v1107
  %v1114 = vsel %vm113, %v1071, 0
  %v1117 = vsel %vm113, %v1072, 0
  %v1120 = vsel %vm113, %v1073, 0
  %v1123 = vsel %vm113, %v1074, 0
  %v1126 = vsel %vm113, %v1075, 0
  %v1129 = vsel %vm113, %v1076, 0
  %v1132 = vsel %vm113, %v1077, 0
  %v1135 = vsel %vm113, %v1078, 0
  %v1138 = vsel %vm113, %v1079, 0
  %v1141 = vsel %vm113, %v1080, 0
  %v1144 = vsel %vm113, %v1081, 0
  %v1147 = vsel %vm113, %v1082, 0
  %v1150 = vsel %vm113, %v1083, 0
  %v1153 = vsel %vm113, %v1084, 0
  %v1156 = vsel %vm113, %v1085, 0
  %v1159 = vsel %vm113, %v1086, 0
  %v1162 = vsel %vm113, %v1087, 0
  %v1165 = vsel %vm113, %v1088, 0
  %v1168 = vsel %vm113, %v1089, 0
  %1170 = vmatprep.subr.bf16.mxu0 0
  %1171 = vmatpush1.bf16.msra.mxu0 %v1109
  %1172 = vmatprep.subr.bf16.mxu0 0
  %1173 = vmatpush1.bf16.msra.mxu0 %v1110
  %1174 = vmatprep.subr.bf16.mxu0 0
  %1175 = vmatpush1.bf16.msra.mxu0 0
  %1176 = vmatprep.subr.bf16.mxu0 0
  %1177 = vmatpush1.bf16.msra.mxu0 0
  %1178 = vmatprep.subr.bf16.mxu0 0
  %1179 = vmatpush1.bf16.msra.mxu0 0
  %1180 = vmatprep.subr.bf16.mxu0 0
  %1181 = vmatpush1.bf16.msra.mxu0 0
  %1182 = vmatprep.subr.bf16.mxu0 0
  %1183 = vmatpush1.bf16.msra.mxu0 0
  %1184 = vmatprep.subr.bf16.mxu0 0
  %1185 = vmatpush1.bf16.msra.mxu0 0
  %1186 = vmatprep.subr.bf16.mxu0 0
  %1187 = vmatpush1.bf16.msra.mxu0 0
  %1188 = vmatprep.subr.bf16.mxu0 0
  %1189 = vmatpush1.bf16.msra.mxu0 0
  %1190 = vmatprep.subr.bf16.mxu0 0
  %1191 = vmatpush1.bf16.msra.mxu0 0
  %1192 = vmatprep.subr.bf16.mxu0 0
  %1193 = vmatpush1.bf16.msra.mxu0 0
  %1194 = vmatprep.subr.bf16.mxu0 0
  %1195 = vmatpush1.bf16.msra.mxu0 0
  %1196 = vmatprep.subr.bf16.mxu0 0
  %1197 = vmatpush1.bf16.msra.mxu0 0
  %1198 = vmatprep.subr.bf16.mxu0 0
  %1199 = vmatpush1.bf16.msra.mxu0 0
  %1200 = vmatprep.subr.bf16.mxu0 0
  %1201 = vmatpush1.bf16.msra.mxu0 0
  %1202 = vmatprep.mubr.bf16.mxu0 0
  %1203 = vmatmul.mubr.bf16.gmra.mrb[0].mxu0 %v1114
  %v1204 = vpop.f32.mrb[0].mxu0
  %v1205 = vadd.f32 %v1099, %v1204
  %v1206 = vpop.f32.mrb[0].mxu0
  %v1207 = vpop.f32.mrb[0].mxu0
  %v1208 = vadd.f32 %v1099, %v1207
  %v1209 = vpop.f32.mrb[0].mxu0
  %1210 = vmatprep.mubr.bf16.mxu0 0
  %1211 = vmatmul.mubr.bf16.gmra.mrb[0].mxu0 %v1117
  %v1212 = vpop.f32.mrb[0].mxu0
  %v1213 = vadd.f32 %v1099, %v1212
  %v1214 = vpop.f32.mrb[0].mxu0
  %v1215 = vpop.f32.mrb[0].mxu0
  %v1216 = vadd.f32 %v1099, %v1215
  %v1217 = vpop.f32.mrb[0].mxu0
  %1218 = vmatprep.mubr.bf16.mxu0 0
  %1219 = vmatmul.mubr.bf16.gmra.mrb[0].mxu0 %v1120
  %v1220 = vpop.f32.mrb[0].mxu0
  %v1221 = vadd.f32 %v1099, %v1220
  %v1222 = vpop.f32.mrb[0].mxu0
  %v1223 = vpop.f32.mrb[0].mxu0
  %v1224 = vadd.f32 %v1099, %v1223
  %v1225 = vpop.f32.mrb[0].mxu0
  %1226 = vmatprep.mubr.bf16.mxu0 0
  %1227 = vmatmul.mubr.bf16.gmra.mrb[0].mxu0 %v1123
  %v1228 = vpop.f32.mrb[0].mxu0
  %v1229 = vadd.f32 %v1099, %v1228
  %v1230 = vpop.f32.mrb[0].mxu0
  %v1231 = vpop.f32.mrb[0].mxu0
  %v1232 = vadd.f32 %v1099, %v1231
  %v1233 = vpop.f32.mrb[0].mxu0
  %1234 = vmatprep.mubr.bf16.mxu0 0
  %1235 = vmatmul.mubr.bf16.gmra.mrb[0].mxu0 %v1126
  %v1236 = vpop.f32.mrb[0].mxu0
  %v1237 = vadd.f32 %v1099, %v1236
  %v1238 = vpop.f32.mrb[0].mxu0
  %v1239 = vpop.f32.mrb[0].mxu0
  %v1240 = vadd.f32 %v1099, %v1239
  %v1241 = vpop.f32.mrb[0].mxu0
  %1242 = vmatprep.mubr.bf16.mxu0 0
  %1243 = vmatmul.mubr.bf16.gmra.mrb[0].mxu0 %v1129
  %v1244 = vpop.f32.mrb[0].mxu0
  %v1245 = vadd.f32 %v1099, %v1244
  %v1246 = vpop.f32.mrb[0].mxu0
  %v1247 = vpop.f32.mrb[0].mxu0
  %v1248 = vadd.f32 %v1099, %v1247
  %v1249 = vpop.f32.mrb[0].mxu0
  %1250 = vmatprep.mubr.bf16.mxu0 0
  %1251 = vmatmul.mubr.bf16.gmra.mrb[0].mxu0 %v1132
  %v1252 = vpop.f32.mrb[0].mxu0
  %v1253 = vadd.f32 %v1099, %v1252
  %v1254 = vpop.f32.mrb[0].mxu0
  %v1255 = vpop.f32.mrb[0].mxu0
  %v1256 = vadd.f32 %v1099, %v1255
  %v1257 = vpop.f32.mrb[0].mxu0
  %1258 = vmatprep.mubr.bf16.mxu0 0
  %1259 = vmatmul.mubr.bf16.gmra.mrb[0].mxu0 %v1135
  %v1260 = vpop.f32.mrb[0].mxu0
  %v1261 = vadd.f32 %v1099, %v1260
  %v1262 = vpop.f32.mrb[0].mxu0
  %v1263 = vpop.f32.mrb[0].mxu0
  %v1264 = vadd.f32 %v1099, %v1263
  %v1265 = vpop.f32.mrb[0].mxu0
  %1266 = vmatprep.mubr.bf16.mxu0 0
  %1267 = vmatmul.mubr.bf16.gmra.mrb[0].mxu0 %v1138
  %v1268 = vpop.f32.mrb[0].mxu0
  %v1269 = vadd.f32 %v1099, %v1268
  %v1270 = vpop.f32.mrb[0].mxu0
  %v1271 = vpop.f32.mrb[0].mxu0
  %v1272 = vadd.f32 %v1099, %v1271
  %v1273 = vpop.f32.mrb[0].mxu0
  %1274 = vmatprep.mubr.bf16.mxu0 0
  %1275 = vmatmul.mubr.bf16.gmra.mrb[0].mxu0 %v1141
  %v1276 = vpop.f32.mrb[0].mxu0
  %v1277 = vadd.f32 %v1099, %v1276
  %v1278 = vpop.f32.mrb[0].mxu0
  %v1279 = vpop.f32.mrb[0].mxu0
  %v1280 = vadd.f32 %v1099, %v1279
  %v1281 = vpop.f32.mrb[0].mxu0
  %1282 = vmatprep.mubr.bf16.mxu0 0
  %1283 = vmatmul.mubr.bf16.gmra.mrb[0].mxu0 %v1144
  %v1284 = vpop.f32.mrb[0].mxu0
  %v1285 = vadd.f32 %v1099, %v1284
  %v1286 = vpop.f32.mrb[0].mxu0
  %v1287 = vpop.f32.mrb[0].mxu0
  %v1288 = vadd.f32 %v1099, %v1287
  %v1289 = vpop.f32.mrb[0].mxu0
  %1290 = vmatprep.mubr.bf16.mxu0 0
  %1291 = vmatmul.mubr.bf16.gmra.mrb[0].mxu0 %v1147
  %v1292 = vpop.f32.mrb[0].mxu0
  %v1293 = vadd.f32 %v1099, %v1292
  %v1294 = vpop.f32.mrb[0].mxu0
  %v1295 = vpop.f32.mrb[0].mxu0
  %v1296 = vadd.f32 %v1099, %v1295
  %v1297 = vpop.f32.mrb[0].mxu0
  %1298 = vmatprep.mubr.bf16.mxu0 0
  %1299 = vmatmul.mubr.bf16.gmra.mrb[0].mxu0 %v1150
  %v1300 = vpop.f32.mrb[0].mxu0
  %v1301 = vadd.f32 %v1099, %v1300
  %v1302 = vpop.f32.mrb[0].mxu0
  %v1303 = vpop.f32.mrb[0].mxu0
  %v1304 = vadd.f32 %v1099, %v1303
  %v1305 = vpop.f32.mrb[0].mxu0
  %1306 = vmatprep.mubr.bf16.mxu0 0
  %1307 = vmatmul.mubr.bf16.gmra.mrb[0].mxu0 %v1153
  %v1308 = vpop.f32.mrb[0].mxu0
  %v1309 = vadd.f32 %v1099, %v1308
  %v1310 = vpop.f32.mrb[0].mxu0
  %v1311 = vpop.f32.mrb[0].mxu0
  %v1312 = vadd.f32 %v1099, %v1311
  %v1313 = vpop.f32.mrb[0].mxu0
  %1314 = vmatprep.mubr.bf16.mxu0 0
  %1315 = vmatmul.mubr.bf16.gmra.mrb[0].mxu0 %v1156
  %v1316 = vpop.f32.mrb[0].mxu0
  %v1317 = vadd.f32 %v1099, %v1316
  %v1318 = vpop.f32.mrb[0].mxu0
  %v1319 = vpop.f32.mrb[0].mxu0
  %v1320 = vadd.f32 %v1099, %v1319
  %v1321 = vpop.f32.mrb[0].mxu0
  %1322 = vmatprep.mubr.bf16.mxu0 0
  %1323 = vmatmul.mubr.bf16.gmra.mrb[0].mxu0 %v1159
  %v1324 = vpop.f32.mrb[0].mxu0
  %v1325 = vadd.f32 %v1099, %v1324
  %v1326 = vpop.f32.mrb[0].mxu0
  %v1327 = vpop.f32.mrb[0].mxu0
  %v1328 = vadd.f32 %v1099, %v1327
  %v1329 = vpop.f32.mrb[0].mxu0
  %1330 = vmatprep.mubr.bf16.mxu0 0
  %1331 = vmatmul.mubr.bf16.gmra.mrb[0].mxu0 %v1162
  %v1332 = vpop.f32.mrb[0].mxu0
  %v1333 = vadd.f32 %v1099, %v1332
  %v1334 = vpop.f32.mrb[0].mxu0
  %v1335 = vpop.f32.mrb[0].mxu0
  %v1336 = vadd.f32 %v1099, %v1335
  %v1337 = vpop.f32.mrb[0].mxu0
  %1338 = vmatprep.mubr.bf16.mxu0 0
  %1339 = vmatmul.mubr.bf16.gmra.mrb[0].mxu0 %v1165
  %v1340 = vpop.f32.mrb[0].mxu0
  %v1341 = vadd.f32 %v1099, %v1340
  %v1342 = vpop.f32.mrb[0].mxu0
  %v1343 = vpop.f32.mrb[0].mxu0
  %v1344 = vadd.f32 %v1099, %v1343
  %v1345 = vpop.f32.mrb[0].mxu0
  %1346 = vmatprep.mubr.bf16.mxu0 0
  %1347 = vmatmul.mubr.bf16.gmra.mrb[0].mxu0 %v1168
  %v1348 = vpop.f32.mrb[0].mxu0
  %v1349 = vadd.f32 %v1099, %v1348
  %v1350 = vpop.f32.mrb[0].mxu0
  %v1351 = vpop.f32.mrb[0].mxu0
  %v1352 = vadd.f32 %v1099, %v1351
  %v1353 = vpop.f32.mrb[0].mxu0
  %1354 = vdwg.mxu0
  %vm1355 = vcmask 64512
  %1356 = vst.msk [vmem:[%s9] sm:$0xff] %vm1355, %v1205
  %1357 = vst.msk [vmem:[%s9 + $0x8] sm:$0xff] %vm1355, %v1208
  %1358 = vst.msk [vmem:[%s9 + $0x10] sm:$0xff] %vm1355, %v1213
  %1359 = vst.msk [vmem:[%s9 + $0x18] sm:$0xff] %vm1355, %v1216
  %1360 = vst.msk [vmem:[%s9 + $0x20] sm:$0xff] %vm1355, %v1221
  %1361 = vst.msk [vmem:[%s9 + $0x28] sm:$0xff] %vm1355, %v1224
  %1362 = vst.msk [vmem:[%s9 + $0x30] sm:$0xff] %vm1355, %v1229
  %1363 = vst.msk [vmem:[%s9 + $0x38] sm:$0xff] %vm1355, %v1232
  %1364 = vst.msk [vmem:[%s9 + $0x40] sm:$0xff] %vm1355, %v1237
  %1365 = vst.msk [vmem:[%s9 + $0x48] sm:$0xff] %vm1355, %v1240
  %1366 = vst.msk [vmem:[%s9 + $0x50] sm:$0xff] %vm1355, %v1245
  %1367 = vst.msk [vmem:[%s9 + $0x58] sm:$0xff] %vm1355, %v1248
  %1368 = vst.msk [vmem:[%s9 + $0x60] sm:$0xff] %vm1355, %v1253
  %1369 = vst.msk [vmem:[%s9 + $0x68] sm:$0xff] %vm1355, %v1256
  %1370 = vst.msk [vmem:[%s9 + $0x70] sm:$0xff] %vm1355, %v1261
  %1371 = vst.msk [vmem:[%s9 + $0x78] sm:$0xff] %vm1355, %v1264
  %1372 = vst.msk [vmem:[%s9 + $0x80] sm:$0xff] %vm1355, %v1269
  %1373 = vst.msk [vmem:[%s9 + $0x88] sm:$0xff] %vm1355, %v1272
  %1374 = vst.msk [vmem:[%s9 + $0x90] sm:$0xff] %vm1355, %v1277
  %1375 = vst.msk [vmem:[%s9 + $0x98] sm:$0xff] %vm1355, %v1280
  %1376 = vst.msk [vmem:[%s9 + $0xa0] sm:$0xff] %vm1355, %v1285
  %1377 = vst.msk [vmem:[%s9 + $0xa8] sm:$0xff] %vm1355, %v1288
  %1378 = vst.msk [vmem:[%s9 + $0xb0] sm:$0xff] %vm1355, %v1293
  %1379 = vst.msk [vmem:[%s9 + $0xb8] sm:$0xff] %vm1355, %v1296
  %1380 = vst.msk [vmem:[%s9 + $0xc0] sm:$0xff] %vm1355, %v1301
  %1381 = vst.msk [vmem:[%s9 + $0xc8] sm:$0xff] %vm1355, %v1304
  %1382 = vst.msk [vmem:[%s9 + $0xd0] sm:$0xff] %vm1355, %v1309
  %1383 = vst.msk [vmem:[%s9 + $0xd8] sm:$0xff] %vm1355, %v1312
  %1384 = vst.msk [vmem:[%s9 + $0xe0] sm:$0xff] %vm1355, %v1317
  %1385 = vst.msk [vmem:[%s9 + $0xe8] sm:$0xff] %vm1355, %v1320
  %1386 = vst.msk [vmem:[%s9 + $0xf0] sm:$0xff] %vm1355, %v1325
  %1387 = vst.msk [vmem:[%s9 + $0xf8] sm:$0xff] %vm1355, %v1328
  %1388 = vst.msk [vmem:[%s9 + $0x100] sm:$0xff] %vm1355, %v1333
  %1389 = vst.msk [vmem:[%s9 + $0x108] sm:$0xff] %vm1355, %v1336
  %1390 = vst.msk [vmem:[%s9 + $0x110] sm:$0xff] %vm1355, %v1341
  %1391 = vst.msk [vmem:[%s9 + $0x118] sm:$0xff] %vm1355, %v1344
  %1392 = vst.msk [vmem:[%s9 + $0x120] sm:$0xff] %vm1355, %v1349
  %1393 = vst.msk [vmem:[%s9 + $0x128] sm:$0xff] %vm1355, %v1352
  // Predicated region
  $region38: #{mlp3_forward.1} parent=0 // pred_check
    _
  $region39: #{mlp3_forward.1} parent=0 // pred_check_branch
    %1395 = sbr.rel (0) target = $region41
  $region40: #{mlp3_forward.1} parent=0 // pred_region
    _
  $region41: #{mlp3_forward.1} parent=0 // pred_fallthru
    _
  // Predicated region
  $region42: #{mlp3_forward.1} parent=0 // pred_check
    _
  $region43: #{mlp3_forward.1} parent=0 // pred_check_branch
    %1397 = sbr.rel (0) target = $region45
  $region44: #{mlp3_forward.1} parent=0 // pred_region
    _
  $region45: #{mlp3_forward.1} parent=0 // pred_fallthru
    _

</llo_original>
